<compile_context>
chip_gen: v5e
topology: v5e:2x2
jax: 0.10.0
libtpu: 0.0.40
codegen_flags: <defaults>
</compile_context>

<pallas_src>
import jax
import jax.numpy as jnp
from jax.experimental import pallas as pl
from jax.experimental.pallas import tpu as pltpu

LANES = 128                     # lane-dense last dim -> unmasked vst
_F32_MAX_TILE_ROWS = 8192       # 8192  x 128 x 4 B = 4 MiB per block
_BF16_MAX_TILE_ROWS = 16384     # 16384 x 128 x 2 B = 4 MiB per block
_SMALL_FALLBACK_BYTES = 256 * 1024


def _skip_kernel(gate_ref, x_ref, y_ref, o_ref):
    # gate_ref: SMEM scalar (shape (1,)) -- the learned skip gate (default 0.5)
    # x_ref / y_ref / o_ref: (tile_rows, LANES) VMEM tiles
    g = gate_ref[0].astype(jnp.float32)
    x = x_ref[...].astype(jnp.float32)
    y = y_ref[...].astype(jnp.float32)
    skip = jax.nn.sigmoid(g * y)
    o_ref[...] = jnp.maximum(x + skip, 0.0).astype(o_ref.dtype)  # ReLU


def skip_connector(x, y, skip_gate, *, small_fallback_bytes=_SMALL_FALLBACK_BYTES):
    """Pallas implementation of SkipConnector.forward.

    x, y      : arrays of identical shape (NCHW), f32 or bf16.
    skip_gate : array with a single element (module default shape=1).
    """
    if y is None:
        return x

    assert x.shape == y.shape, "x and y must have identical shapes"
    # TODO(synk): non-scalar `shape` gates (module shape != 1) would need a
    # broadcast of the gate against y in the wrapper (extra VMEM input).
    assert skip_gate.size == 1, "only a scalar skip_gate is supported"
    gate = skip_gate.reshape((1,)).astype(jnp.float32)

    orig_shape = x.shape
    dtype = x.dtype
    itemsize = jnp.dtype(dtype).itemsize
    total = x.size

    # Tiny deep-layer skip tensors: XLA fuses this elementwise chain perfectly
    # and the reshape + kernel-dispatch fixed cost would dominate.
    if total * itemsize < small_fallback_bytes:
        skip = jax.nn.sigmoid(gate[0] * y.astype(jnp.float32))
        return jnp.maximum(x.astype(jnp.float32) + skip, 0.0).astype(dtype)

    # Flatten -> lane-dense (rows, 128). Only pad the <128-element lane
    # remainder (irregular shapes); never pad to a tile multiple.
    rows = -(-total // LANES)
    padded_total = rows * LANES

    xf = x.reshape(-1)
    yf = y.reshape(-1)
    if padded_total != total:
        pad = padded_total - total            # < 128 elements
        xf = jnp.pad(xf, (0, pad))
        yf = jnp.pad(yf, (0, pad))
    x2 = xf.reshape(rows, LANES)
    y2 = yf.reshape(rows, LANES)

    is_bf16 = dtype == jnp.bfloat16
    max_tile_rows = _BF16_MAX_TILE_ROWS if is_bf16 else _F32_MAX_TILE_ROWS

    if rows <= max_tile_rows:
        # Single block equal to the full array dims (always a legal block).
        tile_rows = rows
    else:
        # Multiple of the sublane packing (8 f32 / 16 bf16); the ragged last
        # block (if any) is masked by Pallas, so no pre-padding is needed.
        tile_rows = max_tile_rows
    grid = (-(-rows // tile_rows),)

    out2 = pl.pallas_call(
        _skip_kernel,
        out_shape=jax.ShapeDtypeStruct((rows, LANES), dtype),
        grid=grid,
        in_specs=[
            pl.BlockSpec(memory_space=pltpu.MemorySpace.SMEM),       # gate
            pl.BlockSpec((tile_rows, LANES), lambda i: (i, 0)),      # x tile
            pl.BlockSpec((tile_rows, LANES), lambda i: (i, 0)),      # y tile
        ],
        out_specs=pl.BlockSpec((tile_rows, LANES), lambda i: (i, 0)),
        cost_estimate=pl.CostEstimate(
            flops=3 * padded_total,
            transcendentals=padded_total,
            bytes_accessed=3 * padded_total * itemsize,
        ),
        compiler_params=pltpu.CompilerParams(
            # TODO(synk): if profiling on v7x shows one TC doing all steps,
            # switch this axis to pltpu.CORE_PARALLEL to split streaming
            # bandwidth across both TensorCores.
            dimension_semantics=("parallel",),
            vmem_limit_bytes=32 * 1024 * 1024,   # 24 MiB used; v5e default is 16 MiB
        ),
    )(gate, x2, y2)

    out = out2.reshape(-1)
    if padded_total != total:
        out = out[:total]
    return out.reshape(orig_shape)


if __name__ == "__main__":
    key = jax.random.PRNGKey(0)
    kx, ky = jax.random.split(key)

    # Deterministic parameter init: Parameter(torch.ones(shape) * skip_weight)
    skip_weight = 0.5
    skip_gate = jnp.ones((1,), dtype=jnp.float32) * skip_weight

    def ref_fn(x, y):
        skip = jax.nn.sigmoid(skip_gate[0] * y.astype(jnp.float32))
        return jnp.maximum(x.astype(jnp.float32) + skip, 0.0).astype(x.dtype)

    # 1) Small module-consistent shape; force the Pallas path (single block).
    x = jax.random.normal(kx, (2, 4, 16, 16), dtype=jnp.float32)
    y = jax.random.normal(ky, (2, 4, 16, 16), dtype=jnp.float32)
    out = jax.block_until_ready(skip_connector(x, y, skip_gate, small_fallback_bytes=0))
    assert out.shape == x.shape
    assert jnp.allclose(out, ref_fn(x, y), atol=1e-6), "mismatch (small shape)"

    # 2) Irregular shape exercising the tiny lane-remainder pad + slice path.
    xi = jax.random.normal(kx, (2, 3, 17, 19), dtype=jnp.float32)
    yi = jax.random.normal(ky, (2, 3, 17, 19), dtype=jnp.float32)
    oi = jax.block_until_ready(skip_connector(xi, yi, skip_gate, small_fallback_bytes=0))
    assert jnp.allclose(oi, ref_fn(xi, yi), atol=1e-6), "mismatch (irregular shape)"

    # 3) Larger activation exercising the multi-block pipelined path (grid=2).
    xl = jax.random.normal(kx, (2, 64, 128, 128), dtype=jnp.float32)
    yl = jax.random.normal(ky, (2, 64, 128, 128), dtype=jnp.float32)
    ol = jax.block_until_ready(skip_connector(xl, yl, skip_gate))
    assert jnp.allclose(ol, ref_fn(xl, yl), atol=1e-6), "mismatch (large shape)"

    print("KERNEL_OK")
</pallas_src>

<mosaic_0001>
module attributes {stable_mosaic.version = 11 : i64} {
  func.func @_skip_kernel(%arg0: i32, %arg1: memref<1xf32, #tpu.memory_space<smem>>, %arg2: memref<16x128xf32, #tpu.memory_space<vmem>>, %arg3: memref<16x128xf32, #tpu.memory_space<vmem>>, %arg4: memref<16x128xf32, #tpu.memory_space<vmem>>) attributes {dimension_semantics = [#tpu.dimension_semantics<parallel>], iteration_bounds = array<i64: 1>, scalar_prefetch = 0 : i64, scratch_operands = 0 : i64, tpu.core_type = #tpu.core_type<tc>, window_params = [{transform_indices = @transform_0, window_bounds = array<i64: 1>}, {transform_indices = @transform_1, window_bounds = array<i64: 16, 128>}, {transform_indices = @transform_2, window_bounds = array<i64: 16, 128>}, {transform_indices = @transform_3, window_bounds = array<i64: 16, 128>}]} {
    %c0 = arith.constant 0 : index
    %0 = memref.load %arg1[%c0] : memref<1xf32, #tpu.memory_space<smem>>
    %c0_0 = arith.constant 0 : index
    %c0_1 = arith.constant 0 : index
    %1 = vector.load %arg2[%c0_0, %c0_1] : memref<16x128xf32, #tpu.memory_space<vmem>>, vector<16x128xf32>
    %c0_2 = arith.constant 0 : index
    %c0_3 = arith.constant 0 : index
    %2 = vector.load %arg3[%c0_2, %c0_3] : memref<16x128xf32, #tpu.memory_space<vmem>>, vector<16x128xf32>
    %3 = vector.broadcast %0 : f32 to vector<16x128xf32>
    %4 = arith.mulf %3, %2 : vector<16x128xf32>
    %5 = arith.negf %4 : vector<16x128xf32>
    %6 = math.exp %5 : vector<16x128xf32>
    %cst = arith.constant 1.000000e+00 : f32
    %7 = vector.broadcast %cst : f32 to vector<16x128xf32>
    %8 = arith.addf %7, %6 : vector<16x128xf32>
    %9 = arith.divf %7, %8 : vector<16x128xf32>
    %10 = arith.addf %1, %9 : vector<16x128xf32>
    %cst_4 = arith.constant 0.000000e+00 : f32
    %11 = vector.broadcast %cst_4 : f32 to vector<16x128xf32>
    %12 = arith.maximumf %10, %11 : vector<16x128xf32>
    %c0_5 = arith.constant 0 : index
    %c0_6 = arith.constant 0 : index
    %13 = vector.load %arg4[%c0_5, %c0_6] : memref<16x128xf32, #tpu.memory_space<vmem>>, vector<16x128xf32>
    tpu.vector_store %arg4[%c0_5, %c0_6], %12 {strides = array<i32>} : memref<16x128xf32, #tpu.memory_space<vmem>>, vector<16x128xf32>,
    return
  }
  func.func @transform_0(%arg0: i32) -> i32 {
    %c0_i32 = arith.constant 0 : i32
    %c0_i32_0 = arith.constant 0 : i32
    return %c0_i32 : i32
  }
  func.func @transform_1(%arg0: i32) -> (i32, i32) {
    %c0_i32 = arith.constant 0 : i32
    %c0_i32_0 = arith.constant 0 : i32
    return %arg0, %c0_i32 : i32, i32
  }
  func.func @transform_2(%arg0: i32) -> (i32, i32) {
    %c0_i32 = arith.constant 0 : i32
    %c0_i32_0 = arith.constant 0 : i32
    return %arg0, %c0_i32 : i32, i32
  }
  func.func @transform_3(%arg0: i32) -> (i32, i32) {
    %c0_i32 = arith.constant 0 : i32
    %c0_i32_0 = arith.constant 0 : i32
    return %arg0, %c0_i32 : i32, i32
  }
}

</mosaic_0001>

<llo_original>
// kernel: tpu_custom_call.1
$region0: #{tpu_custom_call.1}
  #allocation0 [shape = 'u32[]', space=smem, size = 0x4, offset = 0x4, fixed_abs, tag = 'smem constant byte address 0x4 - core index']
  #allocation1 [shape = 'u32[72,128]{1,0:T(1,128)}', space=vmem, size = 0x9000, scoped, tag = 'internal scratch']
  #allocation2 [shape = 'f32[1]{0:T(128)S(6)}', space=smem, size = 0x200, scoped, tag = 'scoped memory for tpu_custom_call.1']
  %s0 = inlined_call_operand.<no memory space> [shape: f32[1], index: 0, kind: input, shape index: {}]
  %s1 = inlined_call_operand.hbm [shape: f32[16,128], index: 1, kind: input, shape index: {}]
  %s2 = inlined_call_operand.hbm [shape: f32[16,128], index: 2, kind: input, shape index: {}]
  %s3 = inlined_call_operand.hbm [shape: f32[16,128], index: 3, kind: output, shape index: {}]
  %s4 = sld [smem:[#allocation0]]
  $region30: #{tpu_custom_call.1} parent=0
    _
  %s6 = ssub.s32 1, %s4
  %s7 = scalar_select 0, %s6, %s4
  %8 = sst [smem:[#allocation2]] %s0
  $region1: #{tpu_custom_call.1} parent=0
    #allocation3 [shape = 'u8[8192]{0}', space=vmem, size = 0x2000, scoped, tag = 'input window, operand 1, single buffered']
    #allocation4 [shape = 's32[1]{0}', space=sflag, size = 0x4, scoped, tag = 'scoped memory for tpu_custom_call.1']
    #allocation5 [shape = 's32[1]{0}', space=sflag, size = 0x4, scoped, tag = 'scoped memory for tpu_custom_call.1']
    #allocation6 [shape = 'u8[8192]{0}', space=vmem, size = 0x2000, scoped, tag = 'input window, operand 2, single buffered']
    #allocation7 [shape = 's32[1]{0}', space=sflag, size = 0x4, scoped, tag = 'scoped memory for tpu_custom_call.1']
    #allocation8 [shape = 'u8[8192]{0}', space=vmem, size = 0x2000, scoped, tag = 'output window, operand 0, single buffered']
    %9 = vsyncpa [#allocation4], 0
    %10 = vsyncpa [#allocation7], 0
    %11 = vsyncpa [#allocation5], 0
    // Predicated region
    $region2: #{tpu_custom_call.1} parent=1 // pred_check
      _
    $region3: #{tpu_custom_call.1} parent=1 // pred_check_branch
      %13 = sbr.rel (0) target = $region5
    $region4: #{tpu_custom_call.1} parent=1 // pred_region
      _
    $region5: #{tpu_custom_call.1} parent=1 // pred_fallthru
      _
    // Predicated region
    $region6: #{tpu_custom_call.1} parent=1 // pred_check
      _
    $region7: #{tpu_custom_call.1} parent=1 // pred_check_branch
      %15 = sbr.rel (0) target = $region9
    $region8: #{tpu_custom_call.1} parent=1 // pred_region
      %17 = vsyncadd [#allocation4], 0
      %s18 = sshll.u32 %s1, 4
      %s19 = int_to_ptr.hbm [resolvable:$true] %s18
      %s20 = sshll.u32 [#allocation3], 4
      %s21 = int_to_ptr.vmem [resolvable:$true] %s20
      %26 = dma.hbm_to_vmem [thread:$0]  %s19, 256, %s21, [#allocation4], 128, 128, 8
    $region9: #{tpu_custom_call.1} parent=1 // pred_fallthru
      _
    // Predicated region
    $region10: #{tpu_custom_call.1} parent=1 // pred_check
      _
    $region11: #{tpu_custom_call.1} parent=1 // pred_check_branch
      %28 = sbr.rel (0) target = $region13
    $region12: #{tpu_custom_call.1} parent=1 // pred_region
      %30 = vsyncadd [#allocation7], 0
      %s31 = sshll.u32 %s2, 4
      %s32 = int_to_ptr.hbm [resolvable:$true] %s31
      %s33 = sshll.u32 [#allocation6], 4
      %s34 = int_to_ptr.vmem [resolvable:$true] %s33
      %39 = dma.hbm_to_vmem [thread:$0]  %s32, 256, %s34, [#allocation7], 128, 128, 8
    $region13: #{tpu_custom_call.1} parent=1 // pred_fallthru
      _
    // Predicated region
    $region14: #{tpu_custom_call.1} parent=1 // pred_check
      _
    $region15: #{tpu_custom_call.1} parent=1 // pred_check_branch
      %41 = sbr.rel (0) target = $region17
    $region16: #{tpu_custom_call.1} parent=1 // pred_region
      %43 = dma.done [#allocation4], 256
    $region17: #{tpu_custom_call.1} parent=1 // pred_fallthru
      _
    // Predicated region
    $region18: #{tpu_custom_call.1} parent=1 // pred_check
      _
    $region19: #{tpu_custom_call.1} parent=1 // pred_check_branch
      %45 = sbr.rel (0) target = $region21
    $region20: #{tpu_custom_call.1} parent=1 // pred_region
      %47 = dma.done [#allocation7], 256
    $region21: #{tpu_custom_call.1} parent=1 // pred_fallthru
      _
    %s48 = sld [smem:[#allocation2]]
    %v49 = vld [vmem:[#allocation3] sm:$0xff]
    %v50 = vld [vmem:[#allocation3 + $0x8] sm:$0xff]
    %v51 = vld [vmem:[#allocation6] sm:$0xff]
    %v52 = vld [vmem:[#allocation6 + $0x8] sm:$0xff]
    %v53 = vstv %s48
    %v54 = vmul.f32 %v53, %v51
    %v55 = vmul.f32 %v53, %v52
    %v56 = vxor.u32 %v54, 2147483648
    %v57 = vxor.u32 %v55, 2147483648
    %v58 = vmul.f32 %v56, 1.442695
    %v59 = vpow.pop %v58
    %v60 = vmul.f32 %v57, 1.442695
    %v61 = vpow.pop %v60
    %v62 = vadd.f32 %v59, 1.0
    %v63 = vadd.f32 %v61, 1.0
    %v64 = vrcp.pop %v62
    %v65 = vmul.f32 %v62, %v64
    %v66 = vsub.f32 1.0, %v65
    %v67 = vmul.f32 %v64, %v66
    %v68 = vadd.f32 %v64, %v67
    %vm69 = vweird.f32 %v62
    %vm70 = vweird.f32 %v64
    %vm71 = vmor %vm69, %vm70
    %v72 = vsel %vm71, %v64, %v68
    %v73 = vand.u32 2147483647, %v62
    %vm74 = vcmp.eq.f32.partialorder %v73, 8.507059e+37
    %v75 = vand.u32 %v62, 2147483648
    %v76 = vor.u32 1.1754944e-38, %v75
    %v77 = vsel %vm74, %v76, %v72
    %v78 = vmul.f32 1.0, %v77
    %v79 = vrcp.pop %v63
    %v80 = vmul.f32 %v63, %v79
    %v81 = vsub.f32 1.0, %v80
    %v82 = vmul.f32 %v79, %v81
    %v83 = vadd.f32 %v79, %v82
    %vm84 = vweird.f32 %v63
    %vm85 = vweird.f32 %v79
    %vm86 = vmor %vm84, %vm85
    %v87 = vsel %vm86, %v79, %v83
    %v88 = vand.u32 2147483647, %v63
    %vm89 = vcmp.eq.f32.partialorder %v88, 8.507059e+37
    %v90 = vand.u32 %v63, 2147483648
    %v91 = vor.u32 1.1754944e-38, %v90
    %v92 = vsel %vm89, %v91, %v87
    %v93 = vmul.f32 1.0, %v92
    %v94 = vadd.f32 %v49, %v78
    %v95 = vadd.f32 %v50, %v93
    %v96 = vmax.f32 %v94, 0.0
    %v97 = vmax.f32 %v95, 0.0
    %98 = vst [vmem:[#allocation8] sm:$0xff] %v96
    %99 = vst [vmem:[#allocation8 + $0x8] sm:$0xff] %v97
    // Predicated region
    $region22: #{tpu_custom_call.1} parent=1 // pred_check
      _
    $region23: #{tpu_custom_call.1} parent=1 // pred_check_branch
      %101 = sbr.rel (0) target = $region25
    $region24: #{tpu_custom_call.1} parent=1 // pred_region
      %103 = vsyncadd [#allocation5], 0
      %s104 = sshll.u32 [#allocation8], 4
      %s105 = int_to_ptr.vmem [resolvable:$true] %s104
      %s106 = sshll.u32 %s3, 4
      %s107 = int_to_ptr.hbm [resolvable:$true] %s106
      %112 = dma.vmem_to_hbm [thread:$0]  %s105, 256, %s107, [#allocation5], 128, 128, 8
    $region25: #{tpu_custom_call.1} parent=1 // pred_fallthru
      _
    // Predicated region
    $region26: #{tpu_custom_call.1} parent=1 // pred_check
      _
    $region27: #{tpu_custom_call.1} parent=1 // pred_check_branch
      %114 = sbr.rel (0) target = $region29
    $region28: #{tpu_custom_call.1} parent=1 // pred_region
      %116 = dma.done [#allocation5], 256
    $region29: #{tpu_custom_call.1} parent=1 // pred_fallthru
      _
    %117 = vsyncpa [#allocation4], 1
    %118 = vsyncpa [#allocation7], 1
    %119 = vsyncpa [#allocation5], 1

</llo_original>
